<compile_context>
chip_gen: v6e
topology: v6e:2x2x1
jax: 0.10.0
libtpu: 0.0.40
codegen_flags: <defaults>
</compile_context>

<pallas_src>
import functools

import jax
import jax.numpy as jnp
from jax import lax
from jax.experimental import pallas as pl
from jax.experimental.pallas import tpu as pltpu


def _round_up(x, m):
    return (x + m - 1) // m * m


def generator_kernel(x_ref, w_ref, b_ref, logits_ref, lse_ref, m_ref, l_ref,
                     *, vocab, tile_v, needs_mask):
    """One (row-tile, vocab-tile) step of `logits = x @ W + b` + online lse.

    x_ref      (tile_m, d_model)   bf16  resident across the vocab axis
    w_ref      (d_model, tile_v)   bf16  streamed per vocab tile
    b_ref      (1, nv*tile_v)      f32   resident (whole bias)
    logits_ref (tile_m, tile_v)    f32   streamed raw logits (this tile)
    lse_ref    (tile_m, 128)       f32   resident; written on the last vocab tile
    m_ref      (tile_m, 1)         f32   scratch: running row max
    l_ref      (tile_m, 1)         f32   scratch: running row sum-exp
    """
    j = pl.program_id(1)
    nv = pl.num_programs(1)

    @pl.when(j == 0)
    def _init():
        m_ref[...] = jnp.full_like(m_ref, -jnp.inf)
        l_ref[...] = jnp.zeros_like(l_ref)

    off = pl.multiple_of(j * tile_v, 128)

    # MXU matmul, f32 accumulation; bias added in f32.
    logits = jnp.dot(x_ref[...], w_ref[...], preferred_element_type=jnp.float32)
    logits = logits + b_ref[:, pl.ds(off, tile_v)]

    # Stream the raw f32 logits for this tile (lane-dense store; out-of-vocab
    # columns of a partial last tile are dropped by the Pallas writeback mask).
    logits_ref[...] = logits.astype(logits_ref.dtype)

    if needs_mask:
        # Vocab remainder: exclude out-of-vocab lanes from the running
        # max / sum-exp (no weight padding pass in the wrapper).
        col = lax.broadcasted_iota(jnp.int32, logits.shape, 1) + off
        masked = jnp.where(col < vocab, logits, -jnp.inf)
    else:
        masked = logits

    # Online max / sum-exp (EUP + XLU slots; mostly hidden under the MXU).
    # Every vocab tile contains at least one in-vocab column, so m_new is
    # always finite and at j == 0 we get exp(-inf) * 0 == 0 (no NaN).
    m_prev = m_ref[...]
    m_new = jnp.maximum(m_prev, jnp.max(masked, axis=-1, keepdims=True))
    l_ref[...] = (l_ref[...] * jnp.exp(m_prev - m_new)
                  + jnp.sum(jnp.exp(masked - m_new), axis=-1, keepdims=True))
    m_ref[...] = m_new

    @pl.when(j == nv - 1)
    def _finalize():
        lse = m_ref[...] + jnp.log(l_ref[...])
        lse_ref[...] = jnp.broadcast_to(lse, lse_ref.shape)


def prepare_generator_weight(w):
    """One-time (parameter-init-time) bf16 cast of the projection weight.

    Doing this per forward call would add a full HBM read+write pass over the
    largest tensor before the kernel even launches; call once and reuse.
    """
    return w.astype(jnp.bfloat16)


@functools.partial(jax.jit, static_argnames=("tile_m", "tile_v", "out_dtype"))
def generator_forward(x, w_bf16, b, *, tile_m=512, tile_v=512,
                      out_dtype=jnp.float32):
    """log_softmax(x @ W + b, axis=-1).

    x: [B, S, d_model]; w_bf16: [d_model, vocab] (see prepare_generator_weight);
    b: [vocab].  Returns [B, S, vocab] in out_dtype.
    """
    B, S, d_model = x.shape
    V = w_bf16.shape[1]
    M = B * S

    # Align/clamp tiles: rows to the sublane (8), vocab to the lane (128).
    tile_m = max(8, min(_round_up(tile_m, 8), _round_up(M, 8)))
    tile_v = max(128, min(_round_up(tile_v, 128), _round_up(V, 128)))

    M_pad = _round_up(M, tile_m)
    nv = pl.cdiv(V, tile_v)
    Vb = nv * tile_v  # resident-bias width (tiny pad; W itself is never padded)

    # Per-call work on the SMALL tensors only.
    x2 = x.reshape(M, d_model).astype(jnp.bfloat16)
    if M_pad != M:
        x2 = jnp.pad(x2, ((0, M_pad - M), (0, 0)))
    b2 = b.astype(jnp.float32).reshape(1, V)
    if Vb != V:
        b2 = jnp.pad(b2, ((0, 0), (0, Vb - V)))

    kernel = functools.partial(generator_kernel, vocab=V, tile_v=tile_v,
                               needs_mask=(V % tile_v != 0))

    # VMEM budget derived from the actual (double-buffered) blocks + headroom.
    vmem_bytes = (2 * tile_m * d_model * 2      # x blocks (bf16)
                  + 2 * d_model * tile_v * 2    # W blocks (bf16)
                  + 2 * Vb * 4                  # resident bias (f32)
                  + 2 * tile_m * tile_v * 4     # streamed logits blocks (f32)
                  + 2 * tile_m * 128 * 4        # lse blocks (f32)
                  + 2 * tile_m * 4)             # scratch
    vmem_limit = min(max(int(vmem_bytes * 1.5) + (4 << 20), 32 << 20), 100 << 20)

    logits_raw, lse = pl.pallas_call(
        kernel,
        out_shape=(
            jax.ShapeDtypeStruct((M_pad, V), jnp.float32),    # raw logits
            jax.ShapeDtypeStruct((M_pad, 128), jnp.float32),  # per-row lse
        ),
        grid=(M_pad // tile_m, nv),
        in_specs=[
            # x: depends only on the row axis -> resident across vocab tiles.
            pl.BlockSpec((tile_m, d_model), lambda i, j: (i, 0)),
            # W: streamed once per (row tile, vocab tile).
            pl.BlockSpec((d_model, tile_v), lambda i, j: (0, j)),
            # bias: a single resident block for the whole kernel.
            pl.BlockSpec((1, Vb), lambda i, j: (0, 0)),
        ],
        out_specs=(
            # Raw logits are streamed tile-by-tile -> VMEM independent of V.
            pl.BlockSpec((tile_m, tile_v), lambda i, j: (i, j)),
            # lse is resident per row tile, written on the last vocab step.
            pl.BlockSpec((tile_m, 128), lambda i, j: (i, 0)),
        ),
        scratch_shapes=[
            pltpu.VMEM((tile_m, 1), jnp.float32),  # running max
            pltpu.VMEM((tile_m, 1), jnp.float32),  # running sum-exp
        ],
        compiler_params=pltpu.CompilerParams(
            dimension_semantics=("parallel", "arbitrary"),
            vmem_limit_bytes=vmem_limit,
        ),
    )(x2, w_bf16, b2)

    # Cheap fused elementwise pass: subtract lse in f32, cast last.
    logp = (logits_raw[:M] - lse[:M, :1]).astype(out_dtype)
    return logp.reshape(B, S, V)


if __name__ == "__main__":
    # Small shapes consistent with the module's forward.
    B, S, d_model, vocab = 2, 8, 32, 512

    key = jax.random.PRNGKey(0)
    kx, kw, kb = jax.random.split(key, 3)

    # Deterministic parameter init (mimics nn.Linear's uniform init range).
    bound = 1.0 / jnp.sqrt(d_model)
    w = jax.random.uniform(kw, (d_model, vocab), jnp.float32, -bound, bound)
    b = jax.random.uniform(kb, (vocab,), jnp.float32, -bound, bound)
    x = jax.random.normal(kx, (B, S, d_model), jnp.float32)

    w_bf16 = prepare_generator_weight(w)  # one-time cast, reused across calls

    # tile_v=128 -> 4 vocab tiles: exercises the multi-tile online lse path.
    out = generator_forward(x, w_bf16, b, tile_m=256, tile_v=128)
    jax.block_until_ready(out)

    # Reference with matching numerics (bf16 inputs, f32 accumulation).
    logits_ref = jnp.dot(x.reshape(-1, d_model).astype(jnp.bfloat16), w_bf16,
                         preferred_element_type=jnp.float32) + b
    ref = jax.nn.log_softmax(logits_ref, axis=-1).reshape(B, S, vocab)

    assert out.shape == (B, S, vocab)
    assert out.dtype == jnp.float32
    err = float(jnp.max(jnp.abs(out - ref)))
    assert jnp.allclose(out, ref, atol=2e-3, rtol=2e-3), f"max abs err = {err}"

    # Second config: vocab NOT a multiple of tile_v -> exercises the in-kernel
    # vocab-remainder mask (no weight padding in the wrapper).
    vocab2 = 320
    w2 = w_bf16[:, :vocab2]
    b2 = b[:vocab2]
    out2 = generator_forward(x, w2, b2, tile_m=256, tile_v=128)
    jax.block_until_ready(out2)
    logits2 = jnp.dot(x.reshape(-1, d_model).astype(jnp.bfloat16), w2,
                      preferred_element_type=jnp.float32) + b2
    ref2 = jax.nn.log_softmax(logits2, axis=-1).reshape(B, S, vocab2)
    err2 = float(jnp.max(jnp.abs(out2 - ref2)))
    assert out2.shape == (B, S, vocab2)
    assert jnp.allclose(out2, ref2, atol=2e-3, rtol=2e-3), f"max abs err = {err2}"

    print("KERNEL_OK")
</pallas_src>

<mosaic_0001>
module attributes {stable_mosaic.version = 11 : i64} {
  func.func @generator_kernel(%arg0: i32, %arg1: i32, %arg2: memref<16x32xbf16, #tpu.memory_space<vmem>>, %arg3: memref<32x128xbf16, #tpu.memory_space<vmem>>, %arg4: memref<1x512xf32, #tpu.memory_space<vmem>>, %arg5: memref<16x128xf32, #tpu.memory_space<vmem>>, %arg6: memref<16x128xf32, #tpu.memory_space<vmem>>, %arg7: memref<16x1xf32, #tpu.memory_space<vmem>>, %arg8: memref<16x1xf32, #tpu.memory_space<vmem>>) attributes {dimension_semantics = [#tpu.dimension_semantics<parallel>, #tpu.dimension_semantics<arbitrary>], iteration_bounds = array<i64: 1, 4>, scalar_prefetch = 0 : i64, scratch_operands = 2 : i64, tpu.core_type = #tpu.core_type<tc>, window_params = [{transform_indices = @transform_0, window_bounds = array<i64: 16, 32>}, {transform_indices = @transform_1, window_bounds = array<i64: 32, 128>}, {pipeline_mode = #tpu.pipeline_mode<synchronous>, transform_indices = @transform_2, window_bounds = array<i64: 1, 512>}, {transform_indices = @transform_3, window_bounds = array<i64: 16, 128>}, {transform_indices = @transform_4, window_bounds = array<i64: 16, 128>}]} {
    %c0_i32 = arith.constant 0 : i32
    %0 = arith.cmpi eq, %arg1, %c0_i32 : i32
    %1 = arith.extui %0 : i1 to i32
    %c0_i32_0 = arith.constant 0 : i32
    %2 = arith.cmpi ne, %1, %c0_i32_0 : i32
    scf.if %2 {
      %cst_18 = arith.constant 0xFF800000 : f32
      %32 = vector.broadcast %cst_18 : f32 to vector<16x1xf32>
      %c0_19 = arith.constant 0 : index
      %c0_20 = arith.constant 0 : index
      %33 = vector.load %arg7[%c0_19, %c0_20] : memref<16x1xf32, #tpu.memory_space<vmem>>, vector<16x1xf32>
      tpu.vector_store %arg7[%c0_19, %c0_20], %32 {strides = array<i32>} : memref<16x1xf32, #tpu.memory_space<vmem>>, vector<16x1xf32>,
      %cst_21 = arith.constant 0.000000e+00 : f32
      %34 = vector.broadcast %cst_21 : f32 to vector<16x1xf32>
      %c0_22 = arith.constant 0 : index
      %c0_23 = arith.constant 0 : index
      %35 = vector.load %arg8[%c0_22, %c0_23] : memref<16x1xf32, #tpu.memory_space<vmem>>, vector<16x1xf32>
      tpu.vector_store %arg8[%c0_22, %c0_23], %34 {strides = array<i32>} : memref<16x1xf32, #tpu.memory_space<vmem>>, vector<16x1xf32>,
    } else {
    }
    %c128_i32 = arith.constant 128 : i32
    %3 = arith.muli %arg1, %c128_i32 : i32
    %4 = tpu.assume_multiple %3, 128 : i32
    %c0 = arith.constant 0 : index
    %c0_1 = arith.constant 0 : index
    %5 = vector.load %arg2[%c0, %c0_1] : memref<16x32xbf16, #tpu.memory_space<vmem>>, vector<16x32xbf16>
    %c0_2 = arith.constant 0 : index
    %c0_3 = arith.constant 0 : index
    %6 = vector.load %arg3[%c0_2, %c0_3] : memref<32x128xbf16, #tpu.memory_space<vmem>>, vector<32x128xbf16>
    %cst = arith.constant dense<0.000000e+00> : vector<16x128xf32>
    %7 = tpu.matmul %5, %6, %cst {dimension_numbers = #tpu.dot_dimension_numbers<[1], [0], [0], [1], [0, 0, 1, 1], [], []>} : vector<16x32xbf16>, vector<32x128xbf16>, vector<16x128xf32> -> vector<16x128xf32>
    %c0_4 = arith.constant 0 : index
    %8 = arith.index_cast %4 : i32 to index
    %9 = vector.load %arg4[%c0_4, %8] : memref<1x512xf32, #tpu.memory_space<vmem>>, vector<1x128xf32>
    %10 = vector.broadcast %9 : vector<1x128xf32> to vector<16x128xf32>
    %11 = arith.addf %7, %10 : vector<16x128xf32>
    %c0_5 = arith.constant 0 : index
    %c0_6 = arith.constant 0 : index
    %12 = vector.load %arg5[%c0_5, %c0_6] : memref<16x128xf32, #tpu.memory_space<vmem>>, vector<16x128xf32>
    tpu.vector_store %arg5[%c0_5, %c0_6], %11 {strides = array<i32>} : memref<16x128xf32, #tpu.memory_space<vmem>>, vector<16x128xf32>,
    %c0_7 = arith.constant 0 : index
    %c0_8 = arith.constant 0 : index
    %13 = vector.load %arg7[%c0_7, %c0_8] : memref<16x1xf32, #tpu.memory_space<vmem>>, vector<16x1xf32>
    %cst_9 = arith.constant dense<0xFF800000> : vector<16xf32>
    %14 = vector.multi_reduction <maximumf>, %11, %cst_9 [1] : vector<16x128xf32> to vector<16xf32>
    %15 = vector.shape_cast %14 : vector<16xf32> to vector<16x1xf32>
    %16 = arith.maximumf %13, %15 : vector<16x1xf32>
    %c0_10 = arith.constant 0 : index
    %c0_11 = arith.constant 0 : index
    %17 = vector.load %arg8[%c0_10, %c0_11] : memref<16x1xf32, #tpu.memory_space<vmem>>, vector<16x1xf32>
    %18 = arith.subf %13, %16 : vector<16x1xf32>
    %19 = math.exp %18 : vector<16x1xf32>
    %20 = arith.mulf %17, %19 : vector<16x1xf32>
    %21 = vector.broadcast %16 : vector<16x1xf32> to vector<16x128xf32>
    %22 = arith.subf %11, %21 : vector<16x128xf32>
    %23 = math.exp %22 : vector<16x128xf32>
    %cst_12 = arith.constant dense<0.000000e+00> : vector<16xf32>
    %24 = vector.multi_reduction <add>, %23, %cst_12 [1] : vector<16x128xf32> to vector<16xf32>
    %25 = vector.shape_cast %24 : vector<16xf32> to vector<16x1xf32>
    %26 = arith.addf %20, %25 : vector<16x1xf32>
    %c0_13 = arith.constant 0 : index
    %c0_14 = arith.constant 0 : index
    %27 = vector.load %arg8[%c0_13, %c0_14] : memref<16x1xf32, #tpu.memory_space<vmem>>, vector<16x1xf32>
    tpu.vector_store %arg8[%c0_13, %c0_14], %26 {strides = array<i32>} : memref<16x1xf32, #tpu.memory_space<vmem>>, vector<16x1xf32>,
    %c0_15 = arith.constant 0 : index
    %c0_16 = arith.constant 0 : index
    %28 = vector.load %arg7[%c0_15, %c0_16] : memref<16x1xf32, #tpu.memory_space<vmem>>, vector<16x1xf32>
    tpu.vector_store %arg7[%c0_15, %c0_16], %16 {strides = array<i32>} : memref<16x1xf32, #tpu.memory_space<vmem>>, vector<16x1xf32>,
    %c3_i32 = arith.constant 3 : i32
    %29 = arith.cmpi eq, %arg1, %c3_i32 : i32
    %30 = arith.extui %29 : i1 to i32
    %c0_i32_17 = arith.constant 0 : i32
    %31 = arith.cmpi ne, %30, %c0_i32_17 : i32
    scf.if %31 {
      %c0_18 = arith.constant 0 : index
      %c0_19 = arith.constant 0 : index
      %32 = vector.load %arg7[%c0_18, %c0_19] : memref<16x1xf32, #tpu.memory_space<vmem>>, vector<16x1xf32>
      %c0_20 = arith.constant 0 : index
      %c0_21 = arith.constant 0 : index
      %33 = vector.load %arg8[%c0_20, %c0_21] : memref<16x1xf32, #tpu.memory_space<vmem>>, vector<16x1xf32>
      %34 = math.log %33 : vector<16x1xf32>
      %35 = arith.addf %32, %34 : vector<16x1xf32>
      %36 = vector.shape_cast %35 : vector<16x1xf32> to vector<16x1xf32>
      %37 = vector.broadcast %36 : vector<16x1xf32> to vector<16x128xf32>
      %c0_22 = arith.constant 0 : index
      %c0_23 = arith.constant 0 : index
      %38 = vector.load %arg6[%c0_22, %c0_23] : memref<16x128xf32, #tpu.memory_space<vmem>>, vector<16x128xf32>
      tpu.vector_store %arg6[%c0_22, %c0_23], %37 {strides = array<i32>} : memref<16x128xf32, #tpu.memory_space<vmem>>, vector<16x128xf32>,
    } else {
    }
    return
  }
  func.func @transform_0(%arg0: i32, %arg1: i32) -> (i32, i32) {
    %c0_i32 = arith.constant 0 : i32
    %c0_i32_0 = arith.constant 0 : i32
    return %arg0, %c0_i32 : i32, i32
  }
  func.func @transform_1(%arg0: i32, %arg1: i32) -> (i32, i32) {
    %c0_i32 = arith.constant 0 : i32
    %c0_i32_0 = arith.constant 0 : i32
    return %c0_i32, %arg1 : i32, i32
  }
  func.func @transform_2(%arg0: i32, %arg1: i32) -> (i32, i32) {
    %c0_i32 = arith.constant 0 : i32
    %c0_i32_0 = arith.constant 0 : i32
    %c0_i32_1 = arith.constant 0 : i32
    return %c0_i32, %c0_i32_0 : i32, i32
  }
  func.func @transform_3(%arg0: i32, %arg1: i32) -> (i32, i32) {
    %c0_i32 = arith.constant 0 : i32
    return %arg0, %arg1 : i32, i32
  }
  func.func @transform_4(%arg0: i32, %arg1: i32) -> (i32, i32) {
    %c0_i32 = arith.constant 0 : i32
    %c0_i32_0 = arith.constant 0 : i32
    return %arg0, %c0_i32 : i32, i32
  }
}

</mosaic_0001>

<llo_original>
// kernel: generator_forward.1
$region0: #{generator_forward.1}
  #allocation0 [shape = 'u32[]', space=smem, size = 0x4, offset = 0x4, fixed_abs, tag = 'smem constant byte address 0x4 - core index']
  #allocation1 [shape = 'u32[144,128]{1,0:T(1,128)}', space=vmem, size = 0x12000, scoped, tag = 'internal scratch']
  #allocation2 [shape = 'f32[16,1]{1,0:T(8,128)}', space=vmem, size = 0x2000, scoped, tag = 'scratch operand']
  #allocation3 [shape = 'f32[16,1]{1,0:T(8,128)}', space=vmem, size = 0x2000, scoped, tag = 'scratch operand']
  %s0 = inlined_call_operand.vmem [shape: bf16[16,32], index: 0, kind: input, shape index: {}]
  %s1 = inlined_call_operand.hbm [shape: bf16[32,512], index: 1, kind: input, shape index: {}]
  %s2 = inlined_call_operand.vmem [shape: f32[1,512], index: 2, kind: input, shape index: {}]
  %s3 = inlined_call_operand.vmem [shape: f32[16,512], index: 3, kind: output, shape index: {0}]
  %s4 = inlined_call_operand.vmem [shape: f32[16,128], index: 4, kind: output, shape index: {1}]
  %5 = xla_tuple %s3, %s4
  %s6 = sld [smem:[#allocation0]]
  $region99: #{generator_forward.1} parent=0
    _
  %s8 = ssub.s32 1, %s6
  %s9 = scalar_select 0, %s8, %s6
  $region1: #{generator_forward.1} parent=0
    #allocation4 [shape = 'u8[16384]{0}', space=vmem, size = 0x4000, scoped, tag = 'input window, operand 1']
    #allocation5 [shape = 's32[2]{0}', space=sflag, size = 0x8, scoped, tag = 'scoped memory for generator_forward.1']
    #allocation6 [shape = 'u8[16384]{0}', space=vmem, size = 0x4000, scoped, tag = 'output window, operand 0']
    %10 = vsyncpa [#allocation5], 0
    %s11 = scalar_lea.sflag [#allocation5], 1
    %12 = vsyncpa %s11, 0
    loop: start=0, step=1, limit=6
    $region2: #{generator_forward.1} parent=1 // loop_pre_header
      _
    $region3: #{generator_forward.1} parent=1 // loop_header
      %s14 = sphi 0, %s18
      %p15 = scmp.ge.s32.totalorder %s14, 6
      %s21 = sphi 0, %s33
      %s22 = sphi 0, %s29
      %s23 = sphi 0, %s21
      %s24 = sphi 0, %s22
      %s25 = sphi 0, %s23
      %s26 = sphi 0, %s24
      %s36 = sphi 0, %s38
      %s39 = sphi 0, %s36
      %s40 = sphi 0, %s39
      %s56 = sphi 0, %s40
      %s62 = sphi 0, %s64
      %s65 = sphi 0, %s62
      %s66 = sphi 0, %s65
      %s82 = sphi 0, %s66
      %s86 = sphi 0, %s86
      %s88 = sphi 0, %s86
      %s89 = sphi 0, %s88
      %s103 = sphi 0, %s89
      %s111 = sphi 0, %s113
      %s114 = sphi 0, %s111
      %s115 = sphi 0, %s114
      %s131 = sphi 0, %s115
      %s137 = sphi 0, %s139
      %s140 = sphi 0, %s137
      %s141 = sphi 0, %s140
      %s157 = sphi 0, %s141
    $region4: #{generator_forward.1} parent=1 // loop_header_branch
      %17 = sbr.rel (%p15) target = $region8
    $region5: #{generator_forward.1} parent=1 // loop_body
      %s19 = ssub.s32 %s14, 1
      %s20 = ssub.s32 %s14, 2
      %s27 = sadd.s32 1, %s22
      %p28 = scmp.ge.s32.totalorder %s27, 4
      %s29 = scalar_select %p28, 0, %s27
      %s30 = sadd.s32 1, %s21
      %s31 = scalar_select %p28, %s30, %s21
      %p32 = scmp.ge.s32.totalorder %s31, 1
      %s33 = scalar_select %p32, 0, %s31
      %s34 = ssub.s32 %s21, %s33
      %p35 = scmp.eq.s32.totalorder %s34, 0
      %s37 = sadd.s32 %s36, 1
      %s38 = scalar_select %p35, %s36, %s37
      %p41 = pneg %p35
      %p42 = scmp.eq.s32.totalorder %s14, 3
      %p43 = por %p41, %p42
      %p44 = scmp.ne.s32.totalorder %s36, %s39
      %p45 = scmp.eq.s32.totalorder %s14, 0
      %p46 = por %p44, %p45
      %p47 = scmp.ne.s32.totalorder %s36, %s39
      %p48 = scmp.eq.s32.totalorder %s19, 3
      %p49 = por %p47, %p48
      %p50 = scmp.ne.s32.totalorder %s39, %s40
      %p51 = scmp.eq.s32.totalorder %s19, 0
      %p52 = por %p50, %p51
      %p53 = scmp.ne.s32.totalorder %s39, %s40
      %p54 = scmp.eq.s32.totalorder %s20, 3
      %p55 = por %p53, %p54
      %p57 = scmp.ne.s32.totalorder %s40, %s56
      %p58 = scmp.eq.s32.totalorder %s20, 0
      %p59 = por %p57, %p58
      %s60 = ssub.s32 %s22, %s29
      %p61 = scmp.eq.s32.totalorder %s60, 0
      %s63 = sadd.s32 %s62, 1
      %s64 = scalar_select %p61, %s62, %s63
      %p67 = pneg %p61
      %p68 = scmp.eq.s32.totalorder %s14, 3
      %p69 = por %p67, %p68
      %p70 = scmp.ne.s32.totalorder %s62, %s65
      %p71 = scmp.eq.s32.totalorder %s14, 0
      %p72 = por %p70, %p71
      %p73 = scmp.ne.s32.totalorder %s62, %s65
      %p74 = scmp.eq.s32.totalorder %s19, 3
      %p75 = por %p73, %p74
      %p76 = scmp.ne.s32.totalorder %s65, %s66
      %p77 = scmp.eq.s32.totalorder %s19, 0
      %p78 = por %p76, %p77
      %p79 = scmp.ne.s32.totalorder %s65, %s66
      %p80 = scmp.eq.s32.totalorder %s20, 3
      %p81 = por %p79, %p80
      %p83 = scmp.ne.s32.totalorder %s66, %s82
      %p84 = scmp.eq.s32.totalorder %s20, 0
      %p85 = por %p83, %p84
      %s87 = sadd.s32 %s86, 1
      %p90 = scmp.eq.s32.totalorder %s14, 3
      %p91 = scmp.ne.s32.totalorder %s86, %s88
      %p92 = scmp.eq.s32.totalorder %s14, 0
      %p93 = por %p91, %p92
      %p94 = scmp.ne.s32.totalorder %s86, %s88
      %p95 = scmp.eq.s32.totalorder %s19, 3
      %p96 = por %p94, %p95
      %p97 = scmp.ne.s32.totalorder %s88, %s89
      %p98 = scmp.eq.s32.totalorder %s19, 0
      %p99 = por %p97, %p98
      %p100 = scmp.ne.s32.totalorder %s88, %s89
      %p101 = scmp.eq.s32.totalorder %s20, 3
      %p102 = por %p100, %p101
      %p104 = scmp.ne.s32.totalorder %s89, %s103
      %p105 = scmp.eq.s32.totalorder %s20, 0
      %p106 = por %p104, %p105
      %s107 = ssub.s32 %s21, %s33
      %s108 = ssub.s32 %s22, %s29
      %s109 = sor.u32 %s107, %s108
      %p110 = scmp.eq.s32.totalorder %s109, 0
      %s112 = sadd.s32 %s111, 1
      %s113 = scalar_select %p110, %s111, %s112
      %p116 = pneg %p110
      %p117 = scmp.eq.s32.totalorder %s14, 3
      %p118 = por %p116, %p117
      %p119 = scmp.ne.s32.totalorder %s111, %s114
      %p120 = scmp.eq.s32.totalorder %s14, 0
      %p121 = por %p119, %p120
      %p122 = scmp.ne.s32.totalorder %s111, %s114
      %p123 = scmp.eq.s32.totalorder %s19, 3
      %p124 = por %p122, %p123
      %p125 = scmp.ne.s32.totalorder %s114, %s115
      %p126 = scmp.eq.s32.totalorder %s19, 0
      %p127 = por %p125, %p126
      %p128 = scmp.ne.s32.totalorder %s114, %s115
      %p129 = scmp.eq.s32.totalorder %s20, 3
      %p130 = por %p128, %p129
      %p132 = scmp.ne.s32.totalorder %s115, %s131
      %p133 = scmp.eq.s32.totalorder %s20, 0
      %p134 = por %p132, %p133
      %s135 = ssub.s32 %s21, %s33
      %p136 = scmp.eq.s32.totalorder %s135, 0
      %s138 = sadd.s32 %s137, 1
      %s139 = scalar_select %p136, %s137, %s138
      %p142 = pneg %p136
      %p143 = scmp.eq.s32.totalorder %s14, 3
      %p144 = por %p142, %p143
      %p145 = scmp.ne.s32.totalorder %s137, %s140
      %p146 = scmp.eq.s32.totalorder %s14, 0
      %p147 = por %p145, %p146
      %p148 = scmp.ne.s32.totalorder %s137, %s140
      %p149 = scmp.eq.s32.totalorder %s19, 3
      %p150 = por %p148, %p149
      %p151 = scmp.ne.s32.totalorder %s140, %s141
      %p152 = scmp.eq.s32.totalorder %s19, 0
      %p153 = por %p151, %p152
      %p154 = scmp.ne.s32.totalorder %s140, %s141
      %p155 = scmp.eq.s32.totalorder %s20, 3
      %p156 = por %p154, %p155
      %p158 = scmp.ne.s32.totalorder %s141, %s157
      %p159 = scmp.eq.s32.totalorder %s20, 0
      %p160 = por %p158, %p159
      %p161 = scmp.le.s32.totalorder 1, %s14
      %p162 = scmp.lt.s32.totalorder %s14, 5
      %p163 = pnand %p161, %p162
      %p164 = pneg %p163
      // Predicated region
      $region9: #{generator_forward.1} parent=5 // pred_check
        _
      $region10: #{generator_forward.1} parent=5 // pred_check_branch
        %166 = sbr.rel (%p163) target = $region12
      $region11: #{generator_forward.1} parent=5 // pred_region
        %s167 = ssub.s32 %s14, 1
        // Predicated region
        $region13: #{generator_forward.1} parent=11 // pred_check
          %p168 = pneg %p52
        $region14: #{generator_forward.1} parent=11 // pred_check_branch
          %170 = sbr.rel (%p168) target = $region16
        $region15: #{generator_forward.1} parent=11 // pred_region
          %s171 = smul.u32 2, %s23
          %p172 = scmp.lt.s32.totalorder %s171, 1
          %s173 = scalar_select %p172, %s171, 1
          %s174 = smul.addr %s173, 4
          %s175 = scalar_lea.vmem %s0, %s174
          %s176 = smul.u32 2, %s23
        $region16: #{generator_forward.1} parent=11 // pred_fallthru
          _
        // Predicated region
        $region17: #{generator_forward.1} parent=11 // pred_check
          %p177 = pneg %p99
        $region18: #{generator_forward.1} parent=11 // pred_check_branch
          %179 = sbr.rel (%p177) target = $region20
        $region19: #{generator_forward.1} parent=11 // pred_region
          _
        $region20: #{generator_forward.1} parent=11 // pred_fallthru
          _
      $region12: #{generator_forward.1} parent=5 // pred_fallthru
        _
      %p180 = scmp.lt.s32.totalorder %s14, 4
      // Predicated region
      $region21: #{generator_forward.1} parent=5 // pred_check
        %p181 = pneg %p180
      $region22: #{generator_forward.1} parent=5 // pred_check_branch
        %183 = sbr.rel (%p181) target = $region24
      $region23: #{generator_forward.1} parent=5 // pred_region
        // Predicated region
        $region25: #{generator_forward.1} parent=23 // pred_check
          %p184 = pneg %p72
        $region26: #{generator_forward.1} parent=23 // pred_check_branch
          %186 = sbr.rel (%p184) target = $region28
        $region27: #{generator_forward.1} parent=23 // pred_region
          %s187 = sand.u32 %s62, 1
          %s188 = scalar_lea.sflag [#allocation5], %s187
          %s189 = sand.u32 %s62, 1
          %s190 = smul.addr %s189, 16
          %s191 = scalar_lea.vmem [#allocation4], %s190
          %s193 = ssub.s32 256, 256
          %194 = vsyncadd %s188, %s193
          %s195 = smul.addr %s22, 64
          %s196 = scalar_lea.hbm %s1, %s195
          %s197 = sshll.u32 %s191, 4
          %s198 = int_to_ptr.vmem [resolvable:$true] %s197
          %203 = dma.hbm_to_vmem [thread:$0]  %s196, 256, %s198, %s188, 256, 64, 4
        $region28: #{generator_forward.1} parent=23 // pred_fallthru
          _
      $region24: #{generator_forward.1} parent=5 // pred_fallthru
        _
      %p204 = scmp.le.s32.totalorder 1, %s14
      %p205 = scmp.lt.s32.totalorder %s14, 5
      %p206 = pnand %p204, %p205
      %p207 = pneg %p206
      // Predicated region
      $region29: #{generator_forward.1} parent=5 // pred_check
        _
      $region30: #{generator_forward.1} parent=5 // pred_check_branch
        %209 = sbr.rel (%p206) target = $region32
      $region31: #{generator_forward.1} parent=5 // pred_region
        %s210 = ssub.s32 %s14, 1
        %s211 = sand.u32 %s65, 1
        %s212 = scalar_lea.sflag [#allocation5], %s211
        %s213 = sand.u32 %s65, 1
        %s214 = smul.addr %s213, 16
        %s215 = scalar_lea.vmem [#allocation4], %s214
        // Predicated region
        $region33: #{generator_forward.1} parent=31 // pred_check
          %p216 = pneg %p78
        $region34: #{generator_forward.1} parent=31 // pred_check_branch
          %218 = sbr.rel (%p216) target = $region36
        $region35: #{generator_forward.1} parent=31 // pred_region
          %219 = dma.done %s212, 256
        $region36: #{generator_forward.1} parent=31 // pred_fallthru
          _
        %s220 = smul.u32 2, %s23
        %p221 = scmp.lt.s32.totalorder %s220, 1
        %s222 = scalar_select %p221, %s220, 1
        %s223 = smul.addr %s222, 4
        %s224 = scalar_lea.vmem %s0, %s223
        %p225 = pneg %p52
        %p226 = pneg %p49
        %s227 = sand.u32 %s65, 1
        %s228 = scalar_lea.sflag [#allocation5], %s227
        %s229 = sand.u32 %s65, 1
        %s230 = smul.addr %s229, 16
        %s231 = scalar_lea.vmem [#allocation4], %s230
        %p232 = pneg %p78
        %p233 = pneg %p75
        %p234 = pneg %p99
        %p235 = pneg %p96
        %p236 = pneg %p127
        %p237 = pneg %p124
        %s238 = sand.u32 %s114, 1
        %s239 = sand.u32 %s114, 1
        %s240 = smul.addr %s239, 16
        %s241 = scalar_lea.vmem [#allocation6], %s240
        %p242 = pneg %p153
        %p243 = pneg %p150
        %s244 = smul.u32 2, %s23
        %p245 = scmp.lt.s32.totalorder %s244, 1
        %s246 = scalar_select %p245, %s244, 1
        %s247 = smul.addr %s246, 8
        %s248 = scalar_lea.vmem %s4, %s247
        %s249 = smul.u32 2, %s23
        %p250 = scmp.lt.s32.totalorder %s249, 1
        %s251 = scalar_select %p250, %s249, 1
        %s252 = smul.addr %s251, 4
        %s253 = scalar_lea.vmem %s0, %s252
        %s254 = smul.u32 2, %s23
        %s255 = smul.u32 2, %s23
        %s256 = smul.u32 2, %s23
        %p257 = scmp.lt.s32.totalorder %s256, 1
        %s258 = scalar_select %p257, %s256, 1
        %s259 = smul.addr %s258, 8
        %s260 = scalar_lea.vmem %s4, %s259
        %s261 = smul.u32 2, %s23
        %p263 = scmp.eq.s32.totalorder %s24, 0
        // Predicated region
        $region37: #{generator_forward.1} parent=31 // pred_check
          %p264 = pneg %p263
        $region38: #{generator_forward.1} parent=31 // pred_check_branch
          %266 = sbr.rel (%p264) target = $region40
        $region39: #{generator_forward.1} parent=31 // pred_region
          %vm267 = vcmask 7168
          %268 = vst.msk [vmem:[#allocation2] sm:$0xff] %vm267, -inf
          %269 = vst.msk [vmem:[#allocation2 + $0x8] sm:$0xff] %vm267, -inf
          %270 = vst.msk [vmem:[#allocation3] sm:$0xff] %vm267, 0.0
          %271 = vst.msk [vmem:[#allocation3 + $0x8] sm:$0xff] %vm267, 0.0
        $region40: #{generator_forward.1} parent=31 // pred_fallthru
          _
        %s272 = smul.u32 %s24, 128
        %v273 = vld [vmem:[%s253] sm:$0xf]
        %v274 = vld [vmem:[%s253 + $0x4] sm:$0xf]
        %v275 = vld [vmem:[%s215] sm:$0xf]
        %v276 = vld [vmem:[%s215 + $0x4] sm:$0xf]
        %v277 = vld [vmem:[%s215 + $0x8] sm:$0xf]
        %v278 = vld [vmem:[%s215 + $0xc] sm:$0xf]
        %s279 = sshra.s32 %s272, 7
        %s280 = sand.u32 %s272, 127
        %s281 = scalar_lea.vmem %s2, %s279
        %v282 = vld [vmem:[%s281] sm:$0x1]
        %v284 = vlaneseq
        %v285 = vshrl.u32 %v284, 7
        %v286 = vsub.s32 0, %v285
        %v287 = vrot.slane %v282, %v286
        %v291 = vunpack.c.l.b16 %v273
        %v292 = vunpack.c.l.b16 %v274
        %v293 = vpack.c.b16 %v292, %v291
        %v298 = vunpack.c.l.b16 %v275
        %v299 = vunpack.c.l.b16 %v276
        %v300 = vunpack.c.l.b16 %v277
        %v301 = vunpack.c.l.b16 %v278
        %v302 = vpack.c.b16 %v299, %v298
        %v303 = vpack.c.b16 %v301, %v300
        %vm306 = vcmask 261120
        %v308 = vsel %vm306, %v293, 0
        %310 = vmatprep.subr.bf16.mxu0 0
        %311 = vmatpush1.bf16.msra.mxu0 0
        %312 = vmatprep.subr.bf16.mxu0 0
        %313 = vmatpush1.bf16.msra.mxu0 0
        %314 = vmatprep.subr.bf16.mxu0 0
        %315 = vmatpush1.bf16.msra.mxu0 0
        %316 = vmatprep.subr.bf16.mxu0 0
        %317 = vmatpush1.bf16.msra.mxu0 0
        %318 = vmatprep.subr.bf16.mxu0 0
        %319 = vmatpush1.bf16.msra.mxu0 0
        %320 = vmatprep.subr.bf16.mxu0 0
        %321 = vmatpush1.bf16.msra.mxu0 0
        %322 = vmatprep.subr.bf16.mxu0 0
        %323 = vmatpush1.bf16.msra.mxu0 %v303
        %324 = vmatprep.subr.bf16.mxu0 0
        %325 = vmatpush1.bf16.msra.mxu0 %v302
        %326 = vmatprep.subr.bf16.mxu0 0
        %327 = vmatpush2.bf16.msra.mxu0 0
        %328 = vmatprep.subr.bf16.mxu0 0
        %329 = vmatpush2.bf16.msra.mxu0 0
        %330 = vmatprep.subr.bf16.mxu0 0
        %331 = vmatpush2.bf16.msra.mxu0 0
        %332 = vmatprep.subr.bf16.mxu0 0
        %333 = vmatpush2.bf16.msra.mxu0 0
        %334 = vmatprep.subr.bf16.mxu0 0
        %335 = vmatpush2.bf16.msra.mxu0 0
        %336 = vmatprep.subr.bf16.mxu0 0
        %337 = vmatpush2.bf16.msra.mxu0 0
        %338 = vmatprep.subr.bf16.mxu0 0
        %339 = vmatpush2.bf16.msra.mxu0 0
        %340 = vmatprep.subr.bf16.mxu0 0
        %341 = vmatpush2.bf16.msra.mxu0 0
        %342 = vmatprep.mubr.bf16.mxu0 0
        %343 = vmatmul.mubr.bf16.gmra.mxu0 %v308
        %v344 = vpop.f32.mrf.mxu0
        %v345 = vadd.f32 %v287, %v344
        %v346 = vpop.f32.mrf.mxu0
        %v347 = vpop.f32.mrf.mxu0
        %v348 = vadd.f32 %v287, %v347
        %v349 = vpop.f32.mrf.mxu0
        %350 = vdwg.mxu0
        %351 = vst [vmem:[%s241] sm:$0xff] %v345
        %352 = vst [vmem:[%s241 + $0x8] sm:$0xff] %v348
        %v353 = vld [vmem:[#allocation2] sm:$0xff]
        %v354 = vld [vmem:[#allocation2 + $0x8] sm:$0xff]
        %355 = vmax.xlane.f32.xlu0 %v345
        %v356 = vpop.xlane.xlu0 %355
        %357 = vmax.xlane.f32.xlu0 %v348
        %v358 = vpop.xlane.xlu0 %357
        %v359 = vmax.f32 %v353, %v356
        %v360 = vmax.f32 %v354, %v358
        %v361 = vld [vmem:[#allocation3] sm:$0xff]
        %v362 = vld [vmem:[#allocation3 + $0x8] sm:$0xff]
        %v363 = vsub.f32 %v353, %v359
        %v364 = vsub.f32 %v354, %v360
        %v365 = vmul.f32 %v363, 1.442695
        %v366 = vpow.pop %v365
        %v367 = vmul.f32 %v364, 1.442695
        %v368 = vpow.pop %v367
        %v369 = vmul.f32 %v361, %v366
        %v370 = vmul.f32 %v362, %v368
        %372 = vset.pattern.permute.xlu0 0
        %373 = vperm.xlu0 %372, %v359
        %v374 = vpop.permute.xlu0 %373
        %377 = vset.pattern.permute.xlu0 0
        %378 = vperm.xlu0 %377, %v360
        %v379 = vpop.permute.xlu0 %378
        %v381 = vsub.f32 %v345, %v374
        %v382 = vsub.f32 %v348, %v379
        %v383 = vmul.f32 %v381, 1.442695
        %v384 = vpow.pop %v383
        %v385 = vmul.f32 %v382, 1.442695
        %v386 = vpow.pop %v385
        %387 = vadd.xlane.f32.xlu0 %v384
        %v388 = vpop.xlane.xlu0 %387
        %389 = vadd.xlane.f32.xlu0 %v386
        %v390 = vpop.xlane.xlu0 %389
        %v391 = vadd.f32 %v369, %v388
        %v392 = vadd.f32 %v370, %v390
        %vm393 = vcmask 7168
        %394 = vst.msk [vmem:[#allocation3] sm:$0xff] %vm393, %v391
        %395 = vst.msk [vmem:[#allocation3 + $0x8] sm:$0xff] %vm393, %v392
        %396 = vst.msk [vmem:[#allocation2] sm:$0xff] %vm393, %v359
        %397 = vst.msk [vmem:[#allocation2 + $0x8] sm:$0xff] %vm393, %v360
        %p398 = scmp.eq.s32.totalorder %s24, 3
        // Predicated region
        $region41: #{generator_forward.1} parent=31 // pred_check
          %p399 = pneg %p398
        $region42: #{generator_forward.1} parent=31 // pred_check_branch
          %401 = sbr.rel (%p399) target = $region44
        $region43: #{generator_forward.1} parent=31 // pred_region
          %v402 = vld [vmem:[#allocation2] sm:$0xff]
          %v403 = vld [vmem:[#allocation2 + $0x8] sm:$0xff]
          %v404 = vld [vmem:[#allocation3] sm:$0xff]
          %v405 = vld [vmem:[#allocation3 + $0x8] sm:$0xff]
          %v406 = vlog2.pop %v404
          %v407 = vmul.f32 %v406, 0.6931472
          %v408 = vlog2.pop %v405
          %v409 = vmul.f32 %v408, 0.6931472
          %v410 = vadd.f32 %v402, %v407
          %v411 = vadd.f32 %v403, %v409
          %413 = vset.pattern.permute.xlu0 0
          %414 = vperm.xlu0 %413, %v410
          %v415 = vpop.permute.xlu0 %414
          %418 = vset.pattern.permute.xlu0 0
          %419 = vperm.xlu0 %418, %v411
          %v420 = vpop.permute.xlu0 %419
          %422 = vst [vmem:[%s260] sm:$0xff] %v415
          %423 = vst [vmem:[%s260 + $0x8] sm:$0xff] %v420
        $region44: #{generator_forward.1} parent=31 // pred_fallthru
          _
        %s424 = sand.u32 %s114, 1
        %s425 = sand.u32 %s114, 1
        %s426 = smul.addr %s425, 16
        %s427 = scalar_lea.vmem [#allocation6], %s426
        %s428 = smul.u32 2, %s23
        %p429 = scmp.lt.s32.totalorder %s428, 1
        %s430 = scalar_select %p429, %s428, 1
        %s431 = smul.addr %s430, 8
        %s432 = scalar_lea.vmem %s4, %s431
        // Predicated region
        $region45: #{generator_forward.1} parent=31 // pred_check
          %p433 = pneg %p124
        $region46: #{generator_forward.1} parent=31 // pred_check_branch
          %435 = sbr.rel (%p433) target = $region48
        $region47: #{generator_forward.1} parent=31 // pred_region
          %s436 = smul.u32 2, %s23
          %s437 = smul.addr %s436, 4
          %s438 = sadd.s32 %s24, %s437
          %s439 = smul.addr %s438, 8
          %s440 = scalar_lea.vmem %s3, %s439
          // Predicated region
          $region49: #{generator_forward.1} parent=47 // pred_check
            _
          $region50: #{generator_forward.1} parent=47 // pred_check_branch
            %442 = sbr.rel (0) target = $region52
          $region51: #{generator_forward.1} parent=47 // pred_region
            // Predicated region
            $region53: #{generator_forward.1} parent=51 // pred_check
              _
            $region54: #{generator_forward.1} parent=51 // pred_check_branch
              %444 = sbr.rel (0) target = $region56
            $region55: #{generator_forward.1} parent=51 // pred_region
              // Predicated region
              $region68: #{generator_forward.1} parent=55 // pred_check
                _
              $region69: #{generator_forward.1} parent=55 // pred_check_branch
                %462 = sbr.rel (0) target = $region71
              $region70: #{generator_forward.1} parent=55 // pred_region
                loop: start=0, step=1, limit=1
                $region72: #{generator_forward.1} parent=70 // loop_pre_header
                  _
                $region73: #{generator_forward.1} parent=70 // loop_header
                  %s464 = sphi 0, %s468
                  %p465 = scmp.ge.s32.totalorder %s464, 1
                  %s469 = sphi %s427, %s427
                  %s470 = sphi %s440, %s440
                $region74: #{generator_forward.1} parent=70 // loop_header_branch
                  %467 = sbr.rel (%p465) target = $region78
                $region75: #{generator_forward.1} parent=70 // loop_body
                  %v471 = vld [vmem:[%s469] sm:$0xff]
                  %472 = vst [vmem:[%s470] sm:$0xff] %v471
                  %v473 = vld [vmem:[%s469 + $0x8] sm:$0xff]
                  %474 = vst [vmem:[%s470 + $0x20] sm:$0xff] %v473
                $region76: #{generator_forward.1} parent=70 // loop_footer
                  %s468 = sadd.s32 1, %s464
                $region77: #{generator_forward.1} parent=70 // loop_footer_branch
                  %463 = sbr.rel target = $region73
                $region78: #{generator_forward.1} parent=70 // loop_exit
                  _
              $region71: #{generator_forward.1} parent=55 // pred_fallthru
                _
              // Predicated region
              $region79: #{generator_forward.1} parent=55 // pred_check
                _
              $region80: #{generator_forward.1} parent=55 // pred_check_branch
                %476 = sbr.rel target = $region82
              $region81: #{generator_forward.1} parent=55 // pred_region
                _
              $region82: #{generator_forward.1} parent=55 // pred_fallthru
                _
            $region56: #{generator_forward.1} parent=51 // pred_fallthru
              _
            // Predicated region
            $region57: #{generator_forward.1} parent=51 // pred_check
              _
            $region58: #{generator_forward.1} parent=51 // pred_check_branch
              %446 = sbr.rel target = $region60
            $region59: #{generator_forward.1} parent=51 // pred_region
              %s448 = ssub.s32 256, 1
              loop: start=0, step=1, limit=1
              $region61: #{generator_forward.1} parent=59 // loop_pre_header
                _
              $region62: #{generator_forward.1} parent=59 // loop_header
                %s450 = sphi 0, %s454
                %p451 = scmp.ge.s32.totalorder %s450, 1
                %s455 = sphi %s427, %s427
                %s456 = sphi %s440, %s440
              $region63: #{generator_forward.1} parent=59 // loop_header_branch
                %453 = sbr.rel (%p451) target = $region67
              $region64: #{generator_forward.1} parent=59 // loop_body
                %v457 = vld [vmem:[%s455] sm:%s448]
                %458 = vst [vmem:[%s456] sm:%s448] %v457
                %v459 = vld [vmem:[%s455 + $0x8] sm:%s448]
                %460 = vst [vmem:[%s456 + $0x20] sm:%s448] %v459
              $region65: #{generator_forward.1} parent=59 // loop_footer
                %s454 = sadd.s32 1, %s450
              $region66: #{generator_forward.1} parent=59 // loop_footer_branch
                %449 = sbr.rel target = $region62
              $region67: #{generator_forward.1} parent=59 // loop_exit
                _
            $region60: #{generator_forward.1} parent=51 // pred_fallthru
              _
          $region52: #{generator_forward.1} parent=47 // pred_fallthru
            _
          %477 = vnop
        $region48: #{generator_forward.1} parent=31 // pred_fallthru
          _
        // Predicated region
        $region83: #{generator_forward.1} parent=31 // pred_check
          %p478 = pneg %p150
        $region84: #{generator_forward.1} parent=31 // pred_check_branch
          %480 = sbr.rel (%p478) target = $region86
        $region85: #{generator_forward.1} parent=31 // pred_region
          %s481 = smul.u32 2, %s23
        $region86: #{generator_forward.1} parent=31 // pred_fallthru
          _
        // Predicated region
        $region87: #{generator_forward.1} parent=31 // pred_check
          %p482 = pneg %p150
        $region88: #{generator_forward.1} parent=31 // pred_check_branch
          %484 = sbr.rel (%p482) target = $region90
        $region89: #{generator_forward.1} parent=31 // pred_region
          %s485 = smul.u32 2, %s23
          %p486 = scmp.lt.s32.totalorder %s485, 1
          %s487 = scalar_select %p486, %s485, 1
          %s488 = smul.addr %s487, 8
          %s489 = scalar_lea.vmem %s4, %s488
        $region90: #{generator_forward.1} parent=31 // pred_fallthru
          _
      $region32: #{generator_forward.1} parent=5 // pred_fallthru
        _
      %p490 = scmp.le.s32.totalorder 2, %s14
      // Predicated region
      $region91: #{generator_forward.1} parent=5 // pred_check
        %p491 = pneg %p490
      $region92: #{generator_forward.1} parent=5 // pred_check_branch
        %493 = sbr.rel (%p491) target = $region94
      $region93: #{generator_forward.1} parent=5 // pred_region
        %s494 = ssub.s32 %s14, 2
        // Predicated region
        $region95: #{generator_forward.1} parent=93 // pred_check
          %p495 = pneg %p130
        $region96: #{generator_forward.1} parent=93 // pred_check_branch
          %497 = sbr.rel (%p495) target = $region98
        $region97: #{generator_forward.1} parent=93 // pred_region
          %s498 = sand.u32 %s115, 1
          %s499 = sand.u32 %s115, 1
          %s500 = smul.addr %s499, 16
          %s501 = scalar_lea.vmem [#allocation6], %s500
        $region98: #{generator_forward.1} parent=93 // pred_fallthru
          _
      $region94: #{generator_forward.1} parent=5 // pred_fallthru
        _
    $region6: #{generator_forward.1} parent=1 // loop_footer
      %s18 = sadd.s32 1, %s14
    $region7: #{generator_forward.1} parent=1 // loop_footer_branch
      %13 = sbr.rel target = $region3
    $region8: #{generator_forward.1} parent=1 // loop_exit
      _
    %502 = vsyncpa [#allocation5], 1
    %s503 = scalar_lea.sflag [#allocation5], 1
    %504 = vsyncpa %s503, 1

</llo_original>
